<compile_context>
chip_gen: v7x
topology: tpu7x:2x2x1
jax: 0.10.0
libtpu: 0.0.40
codegen_flags: <defaults>
</compile_context>

<pallas_src>
import functools
import math

import jax
import jax.numpy as jnp
from jax.experimental import pallas as pl
from jax.experimental.pallas import tpu as pltpu

ALPHA = 0.25
GAMMA = 2.0
_COS_5_DEG = math.cos(math.radians(5.0))
_RAD2DEG = 180.0 / math.pi

# Abramowitz & Stegun 4.4.45-style polynomial for acos on [0, 1];
# |error| <= 6.7e-5 rad (~0.004 degrees).
_AC0 = 1.5707288
_AC1 = -0.2121144
_AC2 = 0.0742610
_AC3 = -0.0187293


def _focal_and_acc(logits_raw, lbl_raw):
    """Sigmoid focal loss (mean over all B*C elements) + top-1 accuracy (%).

    Single exp per element: e = exp(-|x|) is reused for both the numerically
    stable BCE-with-logits term and the sigmoid; the divide uses the EUP
    approx reciprocal (switch to approx=False for tight torch parity tests).
    All math stays in f32 (fast/correct path on v5e as well).
    """
    x = logits_raw.astype(jnp.float32)              # in-kernel cast (free VPU op)
    lbl = lbl_raw.astype(jnp.int32)                 # (B, 1)
    B, C = x.shape
    cls = jax.lax.broadcasted_iota(jnp.int32, (B, C), 1)
    t = (cls == lbl).astype(jnp.float32)            # one-hot labels

    ax = jnp.abs(x)
    e = jnp.exp(-ax)                                # ONE EUP exp per element
    ce = jnp.maximum(x, 0.0) - x * t + jnp.log1p(e)  # stable BCE-with-logits
    inv = pl.reciprocal(1.0 + e, approx=True)       # EUP approx reciprocal
    p = jnp.where(x >= 0.0, inv, e * inv)           # sigmoid(x)

    p_t = p * t + (1.0 - p) * (1.0 - t)
    alpha_t = ALPHA * t + (1.0 - ALPHA) * (1.0 - t)
    one_m = 1.0 - p_t
    fl = alpha_t * ce * (one_m * one_m)             # gamma == 2
    loss_mean = jnp.sum(fl) * (1.0 / float(B * C))

    # argmax over classes (first maximum, matching torch.max tie-breaking);
    # sigmoid is monotone so argmax(sigmoid(x)) == argmax(x).
    xmax = jnp.max(x, axis=1, keepdims=True)
    idx = jnp.min(jnp.where(x == xmax, cls, C), axis=1, keepdims=True)
    acc = jnp.sum((idx == lbl).astype(jnp.float32)) * (100.0 / float(B))
    return loss_mean, acc


def _loss_kernel(vp_w_ref, rho_prob_ref, rho_lbl_ref, phi_prob_ref,
                 phi_lbl_ref, pred_rot_ref, gt_rot_ref, stats_ref):
    rho_loss, rho_acc = _focal_and_acc(rho_prob_ref[...], rho_lbl_ref[...])
    phi_loss, phi_acc = _focal_and_acc(phi_prob_ref[...], phi_lbl_ref[...])

    # Rotations arrive flattened to (B, 9); cast on the resident VMEM tiles.
    pr = pred_rot_ref[...].astype(jnp.float32)
    gr = gt_rot_ref[...].astype(jnp.float32)
    B = pr.shape[0]
    ip_loss = jnp.sum(jnp.abs(pr - gr)) * (1.0 / float(B * 9))   # nn.L1Loss

    # trace(P^T @ G)[b] == sum_j P[b, j] * G[b, j]; clamp cosine to [-1, 1].
    trace = jnp.sum(pr * gr, axis=1, keepdims=True)              # (B, 1)
    cos_t = jnp.clip((trace - 1.0) * 0.5, -1.0, 1.0)

    # In-kernel arccos via polynomial approximation (valid on [0,1]; use
    # acos(-x) = pi - acos(x) for the negative half).  sqrt/EUP.
    ac = jnp.abs(cos_t)
    poly = _AC0 + ac * (_AC1 + ac * (_AC2 + ac * _AC3))
    acos_pos = jnp.sqrt(1.0 - ac) * poly
    angle_rad = jnp.where(cos_t >= 0.0, acos_pos, math.pi - acos_pos)
    mean_angle_deg = jnp.sum(angle_rad) * (_RAD2DEG / float(B))

    # 5-degree hit rate without arccos: angle < 5deg <=> cos(angle) > cos(5deg)
    # (strict '<' on the angle, matching `residual_angle < 5`).
    hits5 = jnp.sum((cos_t > _COS_5_DEG).astype(jnp.float32)) * (1.0 / float(B))

    vp_w = vp_w_ref[0]                               # runtime SMEM scalar
    vp_loss = rho_loss + phi_loss
    loss = vp_w * vp_loss + ip_loss

    # Direct scalar stores to SMEM — no lane packing, no masked vector store.
    stats_ref[0] = rho_loss
    stats_ref[1] = rho_acc
    stats_ref[2] = phi_loss
    stats_ref[3] = phi_acc
    stats_ref[4] = ip_loss
    stats_ref[5] = vp_loss
    stats_ref[6] = loss
    stats_ref[7] = hits5
    stats_ref[8] = mean_angle_deg


@jax.jit
def _vi_net_loss_stats(rho_prob, rho_lbl, phi_prob, phi_lbl,
                       pred_rot, gt_rot, vp_weight):
    B = rho_prob.shape[0]

    # Labels keep their native integer dtype; (B,1) reshape is a no-op.
    rho_lbl = rho_lbl.reshape(B, 1)
    phi_lbl = phi_lbl.reshape(B, 1)

    # (B,3,3) -> (B,9) is a contiguous (free/bitcast) reshape; dtype casts
    # happen inside the kernel so no extra HBM round-trips are introduced.
    pred_rot = pred_rot.reshape(B, 9)
    gt_rot = gt_rot.reshape(B, 9)

    vp_w = jnp.asarray(vp_weight, dtype=jnp.float32).reshape(1)

    return pl.pallas_call(
        _loss_kernel,
        out_shape=jax.ShapeDtypeStruct((9,), jnp.float32),   # all scalar stats
        in_specs=(
            pl.BlockSpec(memory_space=pltpu.MemorySpace.SMEM),  # vp_weight (1,)
            pl.BlockSpec(memory_space=pltpu.MemorySpace.VMEM),  # rho_prob
            pl.BlockSpec(memory_space=pltpu.MemorySpace.VMEM),  # rho_label
            pl.BlockSpec(memory_space=pltpu.MemorySpace.VMEM),  # phi_prob
            pl.BlockSpec(memory_space=pltpu.MemorySpace.VMEM),  # phi_label
            pl.BlockSpec(memory_space=pltpu.MemorySpace.VMEM),  # pred_rot (B,9)
            pl.BlockSpec(memory_space=pltpu.MemorySpace.VMEM),  # gt_rot   (B,9)
        ),
        out_specs=pl.BlockSpec(memory_space=pltpu.MemorySpace.SMEM),
    )(vp_w, rho_prob, rho_lbl, phi_prob, phi_lbl, pred_rot, gt_rot)


def vi_net_loss(pred, gt, vp_weight=1.0):
    # Single (9,) device array comes back from jit; build the dict by slicing
    # outside jit so the jitted graph has exactly one output buffer.
    stats = _vi_net_loss_stats(
        pred["rho_prob"], gt["rho_label"],
        pred["phi_prob"], gt["phi_label"],
        pred["pred_rotation"], gt["rotation_label"],
        vp_weight,
    )
    return {
        "loss": stats[6],
        "vp_loss": stats[5],
        "ip_loss": stats[4],
        "rho_acc": stats[1],
        "phi_acc": stats[3],
        "residual_angle_loss": stats[8],
        "5d_loss": stats[7],
    }


def _random_rotation(key, n):
    """Deterministic batch of orthonormal 3x3 matrices via QR."""
    m = jax.random.normal(key, (n, 3, 3), dtype=jnp.float32)
    q, r = jnp.linalg.qr(m)
    d = jnp.sign(jnp.diagonal(r, axis1=1, axis2=2))
    return q * d[:, None, :]


if __name__ == "__main__":
    key = jax.random.PRNGKey(0)
    k1, k2, k3, k4, k5, k6 = jax.random.split(key, 6)

    B, CR, CP = 4, 64, 128

    pred = {
        "rho_prob": jax.random.normal(k1, (B, CR), dtype=jnp.float32),
        "phi_prob": jax.random.normal(k2, (B, CP), dtype=jnp.float32),
        "pred_rotation": _random_rotation(k3, B),
    }
    gt = {
        "rho_label": jax.random.randint(k4, (B, 1), 0, CR, dtype=jnp.int32),
        "phi_label": jax.random.randint(k5, (B, 1), 0, CP, dtype=jnp.int32),
        "rotation_label": _random_rotation(k6, B),
    }

    out = vi_net_loss(pred, gt, vp_weight=1.0)
    jax.block_until_ready(out["loss"])

    print("KERNEL_OK")
</pallas_src>

<mosaic_0001>
module attributes {stable_mosaic.version = 11 : i64} {
  func.func @_loss_kernel(%arg0: memref<1xf32, #tpu.memory_space<smem>>, %arg1: memref<4x64xf32, #tpu.memory_space<vmem>>, %arg2: memref<4x1xi32, #tpu.memory_space<vmem>>, %arg3: memref<4x128xf32, #tpu.memory_space<vmem>>, %arg4: memref<4x1xi32, #tpu.memory_space<vmem>>, %arg5: memref<4x9xf32, #tpu.memory_space<vmem>>, %arg6: memref<4x9xf32, #tpu.memory_space<vmem>>, %arg7: memref<9xf32, #tpu.memory_space<smem>>) attributes {dimension_semantics = [], scalar_prefetch = 0 : i64, scratch_operands = 0 : i64, tpu.core_type = #tpu.core_type<tc>} {
    %c0 = arith.constant 0 : index
    %c0_0 = arith.constant 0 : index
    %0 = vector.load %arg1[%c0, %c0_0] : memref<4x64xf32, #tpu.memory_space<vmem>>, vector<4x64xf32>
    %c0_1 = arith.constant 0 : index
    %c0_2 = arith.constant 0 : index
    %1 = vector.load %arg2[%c0_1, %c0_2] : memref<4x1xi32, #tpu.memory_space<vmem>>, vector<4x1xi32>
    %2 = tpu.iota {dimensions = array<i32: 1>} : vector<4x64xi32>
    %3 = vector.broadcast %1 : vector<4x1xi32> to vector<4x64xi32>
    %4 = arith.cmpi eq, %2, %3 : vector<4x64xi32>
    %5 = arith.extui %4 : vector<4x64xi1> to vector<4x64xi32>
    %6 = arith.sitofp %5 : vector<4x64xi32> to vector<4x64xf32>
    %7 = math.absf %0 : vector<4x64xf32>
    %cst = arith.constant 0.000000e+00 : f32
    %8 = vector.broadcast %cst : f32 to vector<4x64xf32>
    %9 = arith.subf %8, %7 : vector<4x64xf32>
    %10 = math.exp %9 : vector<4x64xf32>
    %cst_3 = arith.constant 0.000000e+00 : f32
    %11 = vector.broadcast %cst_3 : f32 to vector<4x64xf32>
    %12 = arith.maximumf %0, %11 : vector<4x64xf32>
    %13 = arith.mulf %0, %6 : vector<4x64xf32>
    %14 = arith.subf %12, %13 : vector<4x64xf32>
    %15 = math.log1p %10 : vector<4x64xf32>
    %16 = arith.addf %14, %15 : vector<4x64xf32>
    %cst_4 = arith.constant 1.000000e+00 : f32
    %17 = vector.broadcast %cst_4 : f32 to vector<4x64xf32>
    %18 = arith.addf %17, %10 : vector<4x64xf32>
    %19 = tpu.reciprocal %18 {approx = true} : vector<4x64xf32> -> vector<4x64xf32>
    %cst_5 = arith.constant 0.000000e+00 : f32
    %20 = vector.broadcast %cst_5 : f32 to vector<4x64xf32>
    %21 = arith.cmpf oge, %0, %20 : vector<4x64xf32>
    %22 = arith.mulf %10, %19 : vector<4x64xf32>
    %23 = arith.select %21, %19, %22 : vector<4x64xi1>, vector<4x64xf32>
    %24 = arith.mulf %23, %6 : vector<4x64xf32>
    %cst_6 = arith.constant 1.000000e+00 : f32
    %25 = vector.broadcast %cst_6 : f32 to vector<4x64xf32>
    %26 = arith.subf %25, %23 : vector<4x64xf32>
    %cst_7 = arith.constant 1.000000e+00 : f32
    %27 = vector.broadcast %cst_7 : f32 to vector<4x64xf32>
    %28 = arith.subf %27, %6 : vector<4x64xf32>
    %29 = arith.mulf %26, %28 : vector<4x64xf32>
    %30 = arith.addf %24, %29 : vector<4x64xf32>
    %cst_8 = arith.constant 2.500000e-01 : f32
    %31 = vector.broadcast %cst_8 : f32 to vector<4x64xf32>
    %32 = arith.mulf %31, %6 : vector<4x64xf32>
    %cst_9 = arith.constant 1.000000e+00 : f32
    %33 = vector.broadcast %cst_9 : f32 to vector<4x64xf32>
    %34 = arith.subf %33, %6 : vector<4x64xf32>
    %cst_10 = arith.constant 7.500000e-01 : f32
    %35 = vector.broadcast %cst_10 : f32 to vector<4x64xf32>
    %36 = arith.mulf %35, %34 : vector<4x64xf32>
    %37 = arith.addf %32, %36 : vector<4x64xf32>
    %cst_11 = arith.constant 1.000000e+00 : f32
    %38 = vector.broadcast %cst_11 : f32 to vector<4x64xf32>
    %39 = arith.subf %38, %30 : vector<4x64xf32>
    %40 = arith.mulf %37, %16 : vector<4x64xf32>
    %41 = arith.mulf %39, %39 : vector<4x64xf32>
    %42 = arith.mulf %40, %41 : vector<4x64xf32>
    %43 = vector.shape_cast %42 : vector<4x64xf32> to vector<1x4x64xf32>
    %cst_12 = arith.constant dense<0.000000e+00> : vector<1xf32>
    %44 = vector.multi_reduction <add>, %43, %cst_12 [1, 2] : vector<1x4x64xf32> to vector<1xf32>
    %45 = vector.shape_cast %44 : vector<1xf32> to vector<1x1x1xf32>
    %46 = vector.extract %45[0, 0, 0] : f32 from vector<1x1x1xf32>
    %cst_13 = arith.constant 3.906250e-03 : f32
    %47 = arith.mulf %46, %cst_13 : f32
    %cst_14 = arith.constant dense<0xFF800000> : vector<4xf32>
    %48 = vector.multi_reduction <maximumf>, %0, %cst_14 [1] : vector<4x64xf32> to vector<4xf32>
    %49 = vector.shape_cast %48 : vector<4xf32> to vector<4x1xf32>
    %50 = vector.broadcast %49 : vector<4x1xf32> to vector<4x64xf32>
    %51 = arith.cmpf oeq, %0, %50 : vector<4x64xf32>
    %c64_i32 = arith.constant 64 : i32
    %52 = vector.broadcast %c64_i32 : i32 to vector<4x64xi32>
    %53 = arith.select %51, %2, %52 : vector<4x64xi1>, vector<4x64xi32>
    %cst_15 = arith.constant dense<2147483647> : vector<4xi32>
    %54 = vector.multi_reduction <minsi>, %53, %cst_15 [1] : vector<4x64xi32> to vector<4xi32>
    %55 = vector.shape_cast %54 : vector<4xi32> to vector<4x1xi32>
    %56 = arith.cmpi eq, %55, %1 : vector<4x1xi32>
    %57 = arith.extui %56 : vector<4x1xi1> to vector<4x1xi32>
    %58 = arith.sitofp %57 : vector<4x1xi32> to vector<4x1xf32>
    %59 = vector.shape_cast %58 : vector<4x1xf32> to vector<1x4x1xf32>
    %cst_16 = arith.constant dense<0.000000e+00> : vector<1xf32>
    %60 = vector.multi_reduction <add>, %59, %cst_16 [1, 2] : vector<1x4x1xf32> to vector<1xf32>
    %61 = vector.shape_cast %60 : vector<1xf32> to vector<1x1x1xf32>
    %62 = vector.extract %61[0, 0, 0] : f32 from vector<1x1x1xf32>
    %cst_17 = arith.constant 2.500000e+01 : f32
    %63 = arith.mulf %62, %cst_17 : f32
    %c0_18 = arith.constant 0 : index
    %c0_19 = arith.constant 0 : index
    %64 = vector.load %arg3[%c0_18, %c0_19] : memref<4x128xf32, #tpu.memory_space<vmem>>, vector<4x128xf32>
    %c0_20 = arith.constant 0 : index
    %c0_21 = arith.constant 0 : index
    %65 = vector.load %arg4[%c0_20, %c0_21] : memref<4x1xi32, #tpu.memory_space<vmem>>, vector<4x1xi32>
    %66 = tpu.iota {dimensions = array<i32: 1>} : vector<4x128xi32>
    %67 = vector.broadcast %65 : vector<4x1xi32> to vector<4x128xi32>
    %68 = arith.cmpi eq, %66, %67 : vector<4x128xi32>
    %69 = arith.extui %68 : vector<4x128xi1> to vector<4x128xi32>
    %70 = arith.sitofp %69 : vector<4x128xi32> to vector<4x128xf32>
    %71 = math.absf %64 : vector<4x128xf32>
    %cst_22 = arith.constant 0.000000e+00 : f32
    %72 = vector.broadcast %cst_22 : f32 to vector<4x128xf32>
    %73 = arith.subf %72, %71 : vector<4x128xf32>
    %74 = math.exp %73 : vector<4x128xf32>
    %cst_23 = arith.constant 0.000000e+00 : f32
    %75 = vector.broadcast %cst_23 : f32 to vector<4x128xf32>
    %76 = arith.maximumf %64, %75 : vector<4x128xf32>
    %77 = arith.mulf %64, %70 : vector<4x128xf32>
    %78 = arith.subf %76, %77 : vector<4x128xf32>
    %79 = math.log1p %74 : vector<4x128xf32>
    %80 = arith.addf %78, %79 : vector<4x128xf32>
    %cst_24 = arith.constant 1.000000e+00 : f32
    %81 = vector.broadcast %cst_24 : f32 to vector<4x128xf32>
    %82 = arith.addf %81, %74 : vector<4x128xf32>
    %83 = tpu.reciprocal %82 {approx = true} : vector<4x128xf32> -> vector<4x128xf32>
    %cst_25 = arith.constant 0.000000e+00 : f32
    %84 = vector.broadcast %cst_25 : f32 to vector<4x128xf32>
    %85 = arith.cmpf oge, %64, %84 : vector<4x128xf32>
    %86 = arith.mulf %74, %83 : vector<4x128xf32>
    %87 = arith.select %85, %83, %86 : vector<4x128xi1>, vector<4x128xf32>
    %88 = arith.mulf %87, %70 : vector<4x128xf32>
    %cst_26 = arith.constant 1.000000e+00 : f32
    %89 = vector.broadcast %cst_26 : f32 to vector<4x128xf32>
    %90 = arith.subf %89, %87 : vector<4x128xf32>
    %cst_27 = arith.constant 1.000000e+00 : f32
    %91 = vector.broadcast %cst_27 : f32 to vector<4x128xf32>
    %92 = arith.subf %91, %70 : vector<4x128xf32>
    %93 = arith.mulf %90, %92 : vector<4x128xf32>
    %94 = arith.addf %88, %93 : vector<4x128xf32>
    %cst_28 = arith.constant 2.500000e-01 : f32
    %95 = vector.broadcast %cst_28 : f32 to vector<4x128xf32>
    %96 = arith.mulf %95, %70 : vector<4x128xf32>
    %cst_29 = arith.constant 1.000000e+00 : f32
    %97 = vector.broadcast %cst_29 : f32 to vector<4x128xf32>
    %98 = arith.subf %97, %70 : vector<4x128xf32>
    %cst_30 = arith.constant 7.500000e-01 : f32
    %99 = vector.broadcast %cst_30 : f32 to vector<4x128xf32>
    %100 = arith.mulf %99, %98 : vector<4x128xf32>
    %101 = arith.addf %96, %100 : vector<4x128xf32>
    %cst_31 = arith.constant 1.000000e+00 : f32
    %102 = vector.broadcast %cst_31 : f32 to vector<4x128xf32>
    %103 = arith.subf %102, %94 : vector<4x128xf32>
    %104 = arith.mulf %101, %80 : vector<4x128xf32>
    %105 = arith.mulf %103, %103 : vector<4x128xf32>
    %106 = arith.mulf %104, %105 : vector<4x128xf32>
    %107 = vector.shape_cast %106 : vector<4x128xf32> to vector<1x4x128xf32>
    %cst_32 = arith.constant dense<0.000000e+00> : vector<1xf32>
    %108 = vector.multi_reduction <add>, %107, %cst_32 [1, 2] : vector<1x4x128xf32> to vector<1xf32>
    %109 = vector.shape_cast %108 : vector<1xf32> to vector<1x1x1xf32>
    %110 = vector.extract %109[0, 0, 0] : f32 from vector<1x1x1xf32>
    %cst_33 = arith.constant 0.001953125 : f32
    %111 = arith.mulf %110, %cst_33 : f32
    %cst_34 = arith.constant dense<0xFF800000> : vector<4xf32>
    %112 = vector.multi_reduction <maximumf>, %64, %cst_34 [1] : vector<4x128xf32> to vector<4xf32>
    %113 = vector.shape_cast %112 : vector<4xf32> to vector<4x1xf32>
    %114 = vector.broadcast %113 : vector<4x1xf32> to vector<4x128xf32>
    %115 = arith.cmpf oeq, %64, %114 : vector<4x128xf32>
    %c128_i32 = arith.constant 128 : i32
    %116 = vector.broadcast %c128_i32 : i32 to vector<4x128xi32>
    %117 = arith.select %115, %66, %116 : vector<4x128xi1>, vector<4x128xi32>
    %cst_35 = arith.constant dense<2147483647> : vector<4xi32>
    %118 = vector.multi_reduction <minsi>, %117, %cst_35 [1] : vector<4x128xi32> to vector<4xi32>
    %119 = vector.shape_cast %118 : vector<4xi32> to vector<4x1xi32>
    %120 = arith.cmpi eq, %119, %65 : vector<4x1xi32>
    %121 = arith.extui %120 : vector<4x1xi1> to vector<4x1xi32>
    %122 = arith.sitofp %121 : vector<4x1xi32> to vector<4x1xf32>
    %123 = vector.shape_cast %122 : vector<4x1xf32> to vector<1x4x1xf32>
    %cst_36 = arith.constant dense<0.000000e+00> : vector<1xf32>
    %124 = vector.multi_reduction <add>, %123, %cst_36 [1, 2] : vector<1x4x1xf32> to vector<1xf32>
    %125 = vector.shape_cast %124 : vector<1xf32> to vector<1x1x1xf32>
    %126 = vector.extract %125[0, 0, 0] : f32 from vector<1x1x1xf32>
    %cst_37 = arith.constant 2.500000e+01 : f32
    %127 = arith.mulf %126, %cst_37 : f32
    %c0_38 = arith.constant 0 : index
    %c0_39 = arith.constant 0 : index
    %128 = vector.load %arg5[%c0_38, %c0_39] : memref<4x9xf32, #tpu.memory_space<vmem>>, vector<4x9xf32>
    %c0_40 = arith.constant 0 : index
    %c0_41 = arith.constant 0 : index
    %129 = vector.load %arg6[%c0_40, %c0_41] : memref<4x9xf32, #tpu.memory_space<vmem>>, vector<4x9xf32>
    %130 = arith.subf %128, %129 : vector<4x9xf32>
    %131 = math.absf %130 : vector<4x9xf32>
    %132 = vector.shape_cast %131 : vector<4x9xf32> to vector<1x4x9xf32>
    %cst_42 = arith.constant dense<0.000000e+00> : vector<1xf32>
    %133 = vector.multi_reduction <add>, %132, %cst_42 [1, 2] : vector<1x4x9xf32> to vector<1xf32>
    %134 = vector.shape_cast %133 : vector<1xf32> to vector<1x1x1xf32>
    %135 = vector.extract %134[0, 0, 0] : f32 from vector<1x1x1xf32>
    %cst_43 = arith.constant 0.027777778 : f32
    %136 = arith.mulf %135, %cst_43 : f32
    %137 = arith.mulf %128, %129 : vector<4x9xf32>
    %cst_44 = arith.constant dense<0.000000e+00> : vector<4xf32>
    %138 = vector.multi_reduction <add>, %137, %cst_44 [1] : vector<4x9xf32> to vector<4xf32>
    %139 = vector.shape_cast %138 : vector<4xf32> to vector<4x1xf32>
    %cst_45 = arith.constant 1.000000e+00 : f32
    %140 = vector.broadcast %cst_45 : f32 to vector<4x1xf32>
    %141 = arith.subf %139, %140 : vector<4x1xf32>
    %cst_46 = arith.constant 5.000000e-01 : f32
    %142 = vector.broadcast %cst_46 : f32 to vector<4x1xf32>
    %143 = arith.mulf %141, %142 : vector<4x1xf32>
    %cst_47 = arith.constant -1.000000e+00 : f32
    %cst_48 = arith.constant 1.000000e+00 : f32
    %144 = vector.broadcast %cst_47 : f32 to vector<4x1xf32>
    %145 = arith.maximumf %144, %143 : vector<4x1xf32>
    %146 = vector.broadcast %cst_48 : f32 to vector<4x1xf32>
    %147 = arith.minimumf %146, %145 : vector<4x1xf32>
    %148 = math.absf %147 : vector<4x1xf32>
    %cst_49 = arith.constant -1.872930e-02 : f32
    %149 = vector.broadcast %cst_49 : f32 to vector<4x1xf32>
    %150 = arith.mulf %148, %149 : vector<4x1xf32>
    %cst_50 = arith.constant 7.426100e-02 : f32
    %151 = vector.broadcast %cst_50 : f32 to vector<4x1xf32>
    %152 = arith.addf %151, %150 : vector<4x1xf32>
    %153 = arith.mulf %148, %152 : vector<4x1xf32>
    %cst_51 = arith.constant -0.212114394 : f32
    %154 = vector.broadcast %cst_51 : f32 to vector<4x1xf32>
    %155 = arith.addf %154, %153 : vector<4x1xf32>
    %156 = arith.mulf %148, %155 : vector<4x1xf32>
    %cst_52 = arith.constant 1.57072878 : f32
    %157 = vector.broadcast %cst_52 : f32 to vector<4x1xf32>
    %158 = arith.addf %157, %156 : vector<4x1xf32>
    %cst_53 = arith.constant 1.000000e+00 : f32
    %159 = vector.broadcast %cst_53 : f32 to vector<4x1xf32>
    %160 = arith.subf %159, %148 : vector<4x1xf32>
    %161 = math.sqrt %160 : vector<4x1xf32>
    %162 = arith.mulf %161, %158 : vector<4x1xf32>
    %cst_54 = arith.constant 0.000000e+00 : f32
    %163 = vector.broadcast %cst_54 : f32 to vector<4x1xf32>
    %164 = arith.cmpf oge, %147, %163 : vector<4x1xf32>
    %cst_55 = arith.constant 3.14159274 : f32
    %165 = vector.broadcast %cst_55 : f32 to vector<4x1xf32>
    %166 = arith.subf %165, %162 : vector<4x1xf32>
    %167 = arith.select %164, %162, %166 : vector<4x1xi1>, vector<4x1xf32>
    %168 = vector.shape_cast %167 : vector<4x1xf32> to vector<1x4x1xf32>
    %cst_56 = arith.constant dense<0.000000e+00> : vector<1xf32>
    %169 = vector.multi_reduction <add>, %168, %cst_56 [1, 2] : vector<1x4x1xf32> to vector<1xf32>
    %170 = vector.shape_cast %169 : vector<1xf32> to vector<1x1x1xf32>
    %171 = vector.extract %170[0, 0, 0] : f32 from vector<1x1x1xf32>
    %cst_57 = arith.constant 14.323945 : f32
    %172 = arith.mulf %171, %cst_57 : f32
    %cst_58 = arith.constant 0.99619472 : f32
    %173 = vector.broadcast %cst_58 : f32 to vector<4x1xf32>
    %174 = arith.cmpf ogt, %147, %173 : vector<4x1xf32>
    %175 = arith.extui %174 : vector<4x1xi1> to vector<4x1xi32>
    %176 = arith.sitofp %175 : vector<4x1xi32> to vector<4x1xf32>
    %177 = vector.shape_cast %176 : vector<4x1xf32> to vector<1x4x1xf32>
    %cst_59 = arith.constant dense<0.000000e+00> : vector<1xf32>
    %178 = vector.multi_reduction <add>, %177, %cst_59 [1, 2] : vector<1x4x1xf32> to vector<1xf32>
    %179 = vector.shape_cast %178 : vector<1xf32> to vector<1x1x1xf32>
    %180 = vector.extract %179[0, 0, 0] : f32 from vector<1x1x1xf32>
    %cst_60 = arith.constant 2.500000e-01 : f32
    %181 = arith.mulf %180, %cst_60 : f32
    %c0_61 = arith.constant 0 : index
    %182 = memref.load %arg0[%c0_61] : memref<1xf32, #tpu.memory_space<smem>>
    %183 = arith.addf %47, %111 : f32
    %184 = arith.mulf %182, %183 : f32
    %185 = arith.addf %184, %136 : f32
    %c0_62 = arith.constant 0 : index
    %186 = memref.load %arg7[%c0_62] : memref<9xf32, #tpu.memory_space<smem>>
    memref.store %47, %arg7[%c0_62] : memref<9xf32, #tpu.memory_space<smem>>
    %c1 = arith.constant 1 : index
    %187 = memref.load %arg7[%c1] : memref<9xf32, #tpu.memory_space<smem>>
    memref.store %63, %arg7[%c1] : memref<9xf32, #tpu.memory_space<smem>>
    %c2 = arith.constant 2 : index
    %188 = memref.load %arg7[%c2] : memref<9xf32, #tpu.memory_space<smem>>
    memref.store %111, %arg7[%c2] : memref<9xf32, #tpu.memory_space<smem>>
    %c3 = arith.constant 3 : index
    %189 = memref.load %arg7[%c3] : memref<9xf32, #tpu.memory_space<smem>>
    memref.store %127, %arg7[%c3] : memref<9xf32, #tpu.memory_space<smem>>
    %c4 = arith.constant 4 : index
    %190 = memref.load %arg7[%c4] : memref<9xf32, #tpu.memory_space<smem>>
    memref.store %136, %arg7[%c4] : memref<9xf32, #tpu.memory_space<smem>>
    %c5 = arith.constant 5 : index
    %191 = memref.load %arg7[%c5] : memref<9xf32, #tpu.memory_space<smem>>
    memref.store %183, %arg7[%c5] : memref<9xf32, #tpu.memory_space<smem>>
    %c6 = arith.constant 6 : index
    %192 = memref.load %arg7[%c6] : memref<9xf32, #tpu.memory_space<smem>>
    memref.store %185, %arg7[%c6] : memref<9xf32, #tpu.memory_space<smem>>
    %c7 = arith.constant 7 : index
    %193 = memref.load %arg7[%c7] : memref<9xf32, #tpu.memory_space<smem>>
    memref.store %181, %arg7[%c7] : memref<9xf32, #tpu.memory_space<smem>>
    %c8 = arith.constant 8 : index
    %194 = memref.load %arg7[%c8] : memref<9xf32, #tpu.memory_space<smem>>
    memref.store %172, %arg7[%c8] : memref<9xf32, #tpu.memory_space<smem>>
    return
  }
}

</mosaic_0001>

<llo_original>
// kernel: _vi_net_loss_stats.1
$region0: #{_vi_net_loss_stats.1}
  #allocation0 [shape = 'u32[]', space=smem, size = 0x4, offset = 0x4, fixed_abs, tag = 'smem constant byte address 0x4 - core index']
  #allocation1 [shape = 'u32[144,128]{1,0:T(1,128)}', space=vmem, size = 0x12000, scoped, tag = 'internal scratch']
  #allocation2 [shape = 'f32[1]{0:T(128)S(6)}', space=smem, size = 0x200, scoped, tag = 'scoped memory for _vi_net_loss_stats.1']
  %s0 = inlined_call_operand.<no memory space> [shape: f32[1], index: 0, kind: input, shape index: {}]
  %s1 = inlined_call_operand.vmem [shape: f32[4,64], index: 1, kind: input, shape index: {}]
  %s2 = inlined_call_operand.vmem [shape: s32[4,1], index: 2, kind: input, shape index: {}]
  %s3 = inlined_call_operand.vmem [shape: f32[4,128], index: 3, kind: input, shape index: {}]
  %s4 = inlined_call_operand.vmem [shape: s32[4,1], index: 4, kind: input, shape index: {}]
  %s5 = inlined_call_operand.vmem [shape: f32[4,9], index: 5, kind: input, shape index: {}]
  %s6 = inlined_call_operand.vmem [shape: f32[4,9], index: 6, kind: input, shape index: {}]
  %s7 = inlined_call_operand.hbm [shape: f32[9], index: 7, kind: output, shape index: {}]
  %s8 = sld [smem:[#allocation0]]
  $region38: #{_vi_net_loss_stats.1} parent=0
    _
  %s10 = ssub.s32 1, %s8
  %s11 = scalar_select 0, %s10, %s8
  %12 = sst [smem:[#allocation2]] %s0
  $region1: #{_vi_net_loss_stats.1} parent=0
    #allocation3 [shape = 'u8[512]{0}', space=smem, size = 0x200, scoped, tag = 'output window, operand 0, single buffered']
    #allocation4 [shape = 's32[1]{0}', space=sflag, size = 0x4, scoped, tag = 'scoped memory for _vi_net_loss_stats.1']
    %13 = vsyncpa [#allocation4], 0
    // Predicated region
    $region2: #{_vi_net_loss_stats.1} parent=1 // pred_check
      _
    $region3: #{_vi_net_loss_stats.1} parent=1 // pred_check_branch
      %15 = sbr.rel (0) target = $region5
    $region4: #{_vi_net_loss_stats.1} parent=1 // pred_region
      _
    $region5: #{_vi_net_loss_stats.1} parent=1 // pred_fallthru
      _
    // Predicated region
    $region6: #{_vi_net_loss_stats.1} parent=1 // pred_check
      _
    $region7: #{_vi_net_loss_stats.1} parent=1 // pred_check_branch
      %17 = sbr.rel (0) target = $region9
    $region8: #{_vi_net_loss_stats.1} parent=1 // pred_region
      _
    $region9: #{_vi_net_loss_stats.1} parent=1 // pred_fallthru
      _
    // Predicated region
    $region10: #{_vi_net_loss_stats.1} parent=1 // pred_check
      _
    $region11: #{_vi_net_loss_stats.1} parent=1 // pred_check_branch
      %19 = sbr.rel (0) target = $region13
    $region12: #{_vi_net_loss_stats.1} parent=1 // pred_region
      _
    $region13: #{_vi_net_loss_stats.1} parent=1 // pred_fallthru
      _
    // Predicated region
    $region14: #{_vi_net_loss_stats.1} parent=1 // pred_check
      _
    $region15: #{_vi_net_loss_stats.1} parent=1 // pred_check_branch
      %21 = sbr.rel (0) target = $region17
    $region16: #{_vi_net_loss_stats.1} parent=1 // pred_region
      _
    $region17: #{_vi_net_loss_stats.1} parent=1 // pred_fallthru
      _
    // Predicated region
    $region18: #{_vi_net_loss_stats.1} parent=1 // pred_check
      _
    $region19: #{_vi_net_loss_stats.1} parent=1 // pred_check_branch
      %23 = sbr.rel (0) target = $region21
    $region20: #{_vi_net_loss_stats.1} parent=1 // pred_region
      _
    $region21: #{_vi_net_loss_stats.1} parent=1 // pred_fallthru
      _
    // Predicated region
    $region22: #{_vi_net_loss_stats.1} parent=1 // pred_check
      _
    $region23: #{_vi_net_loss_stats.1} parent=1 // pred_check_branch
      %25 = sbr.rel (0) target = $region25
    $region24: #{_vi_net_loss_stats.1} parent=1 // pred_region
      _
    $region25: #{_vi_net_loss_stats.1} parent=1 // pred_fallthru
      _
    // Predicated region
    $region26: #{_vi_net_loss_stats.1} parent=1 // pred_check
      _
    $region27: #{_vi_net_loss_stats.1} parent=1 // pred_check_branch
      %27 = sbr.rel (0) target = $region29
    $region28: #{_vi_net_loss_stats.1} parent=1 // pred_region
      _
    $region29: #{_vi_net_loss_stats.1} parent=1 // pred_fallthru
      _
    %v28 = vld [vmem:[%s1] sm:$0xf]
    %v29 = vld [vmem:[%s2] sm:$0xf]
    %v30 = vlaneseq
    %v31 = vand.u32 %v30, 127
    %32 = vset.pattern.permute.xlu0 0
    %33 = vperm.xlu0 %32, %v29
    %v34 = vpop.permute.xlu0 %33
    %vm35 = vcmp.eq.s32.totalorder %v31, %v34
    %v36 = vsel %vm35, 1, 0
    %v37 = vcvt.s32.f32 %v36
    %v38 = vand.u32 2147483647, %v28
    %v39 = vsub.f32 0.0, %v38
    %v40 = vmul.f32 %v39, 1.442695
    %v41 = vpow.pop %v40
    %v42 = vmax.f32 %v28, 0.0
    %v43 = vmul.f32 %v28, %v37
    %v44 = vsub.f32 %v42, %v43
    %v45 = vadd.f32 %v41, 1.0
    %v46 = vlog2.pop %v45
    %v47 = vmul.f32 %v46, 0.6931472
    %v48 = vmul.f32 -0.5, %v41
    %v49 = vadd.f32 %v48, 1.0
    %v50 = vmul.f32 %v49, %v41
    %v51 = vand.u32 2147483647, %v41
    %vm52 = vcmp.lt.f32.partialorder %v51, 0.0004427343
    %v53 = vsel %vm52, %v50, %v47
    %v54 = vadd.f32 %v44, %v53
    %v55 = vadd.f32 %v41, 1.0
    %v56 = vrcp.pop %v55
    %vm57 = vcmp.ge.f32.partialorder %v28, 0.0
    %v58 = vmul.f32 %v41, %v56
    %v59 = vsel %vm57, %v56, %v58
    %v60 = vmul.f32 %v59, %v37
    %v61 = vsub.f32 1.0, %v59
    %v62 = vsub.f32 1.0, %v37
    %v63 = vmul.f32 %v61, %v62
    %v64 = vadd.f32 %v60, %v63
    %v65 = vmul.f32 %v37, 0.25
    %v66 = vmul.f32 %v62, 0.75
    %v67 = vadd.f32 %v65, %v66
    %v68 = vsub.f32 1.0, %v64
    %v69 = vmul.f32 %v67, %v54
    %v70 = vmul.f32 %v68, %v68
    %v71 = vmul.f32 %v69, %v70
    %vm72 = vcmask 519168
    %v73 = vsel %vm72, %v71, 0.0
    %74 = vadd.xlane.f32.xlu0 %v73
    %v75 = vpop.xlane.xlu0 %74
    %v76 = vrot.slane %v75, 4
    %v77 = vadd.f32 %v75, %v76
    %v78 = vrot.slane %v77, 2
    %v79 = vadd.f32 %v77, %v78
    %v80 = vrot.slane %v79, 1
    %v81 = vadd.f32 %v79, %v80
    %s82 = vtos %v81
    %s83 = smul.f32 %s82, 0.00390625
    %v84 = vsel %vm72, %v28, -inf
    %85 = vmax.xlane.f32.xlu0 %v84
    %v86 = vpop.xlane.xlu0 %85
    %vm87 = vcmp.eq.f32.partialorder %v28, %v86
    %v88 = vsel %vm87, %v31, 64
    %v89 = vsel %vm72, %v88, 2147483647
    %v90 = vand.u32 %v89, 65535
    %v91 = vshra.s32 %v89, 16
    %v92 = vcvt.s32.f32 %v90
    %v93 = vcvt.s32.f32 %v91
    %94 = vmin.xlane.f32.xlu0 %v93
    %v95 = vpop.xlane.xlu0 %94
    %vm96 = vcmp.eq.f32.partialorder %v93, %v95
    %v97 = vsel %vm96, %v92, inf
    %98 = vmin.xlane.f32.xlu0 %v97
    %v99 = vpop.xlane.xlu0 %98
    %v100 = vcvt.f32.s32 %v99
    %v101 = vcvt.f32.s32 %v95
    %v102 = vshll.u32 %v101, 16
    %v103 = vadd.s32 %v102, %v100
    %vm104 = vcmp.eq.s32.totalorder %v103, %v29
    %v105 = vsel %vm104, 1, 0
    %v106 = vcvt.s32.f32 %v105
    %vm107 = vcmask 3072
    %v108 = vsel %vm107, %v106, 0.0
    %109 = vadd.xlane.f32.xlu0 %v108
    %v110 = vpop.xlane.xlu0 %109
    %v111 = vrot.slane %v110, 4
    %v112 = vadd.f32 %v110, %v111
    %v113 = vrot.slane %v112, 2
    %v114 = vadd.f32 %v112, %v113
    %v115 = vrot.slane %v114, 1
    %v116 = vadd.f32 %v114, %v115
    %s117 = vtos %v116
    %s118 = smul.f32 %s117, 25.0
    %v119 = vld [vmem:[%s3] sm:$0xf]
    %v120 = vld [vmem:[%s4] sm:$0xf]
    %121 = vset.pattern.permute.xlu0 0
    %122 = vperm.xlu0 %121, %v120
    %v123 = vpop.permute.xlu0 %122
    %vm124 = vcmp.eq.s32.totalorder %v31, %v123
    %v125 = vsel %vm124, 1, 0
    %v126 = vcvt.s32.f32 %v125
    %v127 = vand.u32 2147483647, %v119
    %v128 = vsub.f32 0.0, %v127
    %v129 = vmul.f32 %v128, 1.442695
    %v130 = vpow.pop %v129
    %v131 = vmax.f32 %v119, 0.0
    %v132 = vmul.f32 %v119, %v126
    %v133 = vsub.f32 %v131, %v132
    %v134 = vadd.f32 %v130, 1.0
    %v135 = vlog2.pop %v134
    %v136 = vmul.f32 %v135, 0.6931472
    %v137 = vmul.f32 -0.5, %v130
    %v138 = vadd.f32 %v137, 1.0
    %v139 = vmul.f32 %v138, %v130
    %v140 = vand.u32 2147483647, %v130
    %vm141 = vcmp.lt.f32.partialorder %v140, 0.0004427343
    %v142 = vsel %vm141, %v139, %v136
    %v143 = vadd.f32 %v133, %v142
    %v144 = vadd.f32 %v130, 1.0
    %v145 = vrcp.pop %v144
    %vm146 = vcmp.ge.f32.partialorder %v119, 0.0
    %v147 = vmul.f32 %v130, %v145
    %v148 = vsel %vm146, %v145, %v147
    %v149 = vmul.f32 %v148, %v126
    %v150 = vsub.f32 1.0, %v148
    %v151 = vsub.f32 1.0, %v126
    %v152 = vmul.f32 %v150, %v151
    %v153 = vadd.f32 %v149, %v152
    %v154 = vmul.f32 %v126, 0.25
    %v155 = vmul.f32 %v151, 0.75
    %v156 = vadd.f32 %v154, %v155
    %v157 = vsub.f32 1.0, %v153
    %v158 = vmul.f32 %v156, %v143
    %v159 = vmul.f32 %v157, %v157
    %v160 = vmul.f32 %v158, %v159
    %vm161 = vcmask 1043456
    %v162 = vsel %vm161, %v160, 0.0
    %163 = vadd.xlane.f32.xlu0 %v162
    %v164 = vpop.xlane.xlu0 %163
    %v165 = vrot.slane %v164, 4
    %v166 = vadd.f32 %v164, %v165
    %v167 = vrot.slane %v166, 2
    %v168 = vadd.f32 %v166, %v167
    %v169 = vrot.slane %v168, 1
    %v170 = vadd.f32 %v168, %v169
    %s171 = vtos %v170
    %s172 = smul.f32 %s171, 0.001953125
    %v173 = vsel %vm161, %v119, -inf
    %174 = vmax.xlane.f32.xlu0 %v173
    %v175 = vpop.xlane.xlu0 %174
    %vm176 = vcmp.eq.f32.partialorder %v119, %v175
    %v177 = vsel %vm176, %v31, 128
    %v178 = vsel %vm161, %v177, 2147483647
    %v179 = vand.u32 %v178, 65535
    %v180 = vshra.s32 %v178, 16
    %v181 = vcvt.s32.f32 %v179
    %v182 = vcvt.s32.f32 %v180
    %183 = vmin.xlane.f32.xlu0 %v182
    %v184 = vpop.xlane.xlu0 %183
    %vm185 = vcmp.eq.f32.partialorder %v182, %v184
    %v186 = vsel %vm185, %v181, inf
    %187 = vmin.xlane.f32.xlu0 %v186
    %v188 = vpop.xlane.xlu0 %187
    %v189 = vcvt.f32.s32 %v188
    %v190 = vcvt.f32.s32 %v184
    %v191 = vshll.u32 %v190, 16
    %v192 = vadd.s32 %v191, %v189
    %vm193 = vcmp.eq.s32.totalorder %v192, %v120
    %v194 = vsel %vm193, 1, 0
    %v195 = vcvt.s32.f32 %v194
    %v196 = vsel %vm107, %v195, 0.0
    %197 = vadd.xlane.f32.xlu0 %v196
    %v198 = vpop.xlane.xlu0 %197
    %v199 = vrot.slane %v198, 4
    %v200 = vadd.f32 %v198, %v199
    %v201 = vrot.slane %v200, 2
    %v202 = vadd.f32 %v200, %v201
    %v203 = vrot.slane %v202, 1
    %v204 = vadd.f32 %v202, %v203
    %s205 = vtos %v204
    %s206 = smul.f32 %s205, 25.0
    %v207 = vld [vmem:[%s5] sm:$0xf]
    %v208 = vld [vmem:[%s6] sm:$0xf]
    %v209 = vsub.f32 %v207, %v208
    %v210 = vand.u32 2147483647, %v209
    %vm211 = vcmask 68608
    %v212 = vsel %vm211, %v210, 0.0
    %213 = vadd.xlane.f32.xlu0 %v212
    %v214 = vpop.xlane.xlu0 %213
    %v215 = vrot.slane %v214, 4
    %v216 = vadd.f32 %v214, %v215
    %v217 = vrot.slane %v216, 2
    %v218 = vadd.f32 %v216, %v217
    %v219 = vrot.slane %v218, 1
    %v220 = vadd.f32 %v218, %v219
    %s221 = vtos %v220
    %s222 = smul.f32 %s221, 0.027777778
    %v223 = vmul.f32 %v207, %v208
    %v224 = vsel %vm211, %v223, 0.0
    %225 = vadd.xlane.f32.xlu0 %v224
    %v226 = vpop.xlane.xlu0 %225
    %v227 = vsub.f32 %v226, 1.0
    %v228 = vmul.f32 %v227, 0.5
    %v229 = vmax.f32 %v228, -1.0
    %v230 = vmin.f32 %v229, 1.0
    %v231 = vand.u32 2147483647, %v230
    %v232 = vmul.f32 %v231, -0.0187293
    %v233 = vadd.f32 %v232, 0.074261
    %v234 = vmul.f32 %v231, %v233
    %v235 = vadd.f32 %v234, -0.2121144
    %v236 = vmul.f32 %v231, %v235
    %v237 = vadd.f32 %v236, 1.5707288
    %v238 = vsub.f32 1.0, %v231
    %v239 = vrsqrt.pop %v238
    %v240 = vmul.f32 %v238, %v239
    %vm241 = vcmp.eq.f32.partialorder %v238, inf
    %v242 = vsel %vm241, %v238, %v240
    %vm243 = vcmp.eq.f32.partialorder %v238, 0.0
    %v244 = vand.u32 %v238, 2147483648
    %v245 = vsel %vm243, %v244, %v242
    %v246 = vmul.f32 %v245, %v237
    %vm247 = vcmp.ge.f32.partialorder %v230, 0.0
    %v248 = vsub.f32 3.1415927, %v246
    %v249 = vsel %vm247, %v246, %v248
    %v250 = vsel %vm107, %v249, 0.0
    %251 = vadd.xlane.f32.xlu0 %v250
    %v252 = vpop.xlane.xlu0 %251
    %v253 = vrot.slane %v252, 4
    %v254 = vadd.f32 %v252, %v253
    %v255 = vrot.slane %v254, 2
    %v256 = vadd.f32 %v254, %v255
    %v257 = vrot.slane %v256, 1
    %v258 = vadd.f32 %v256, %v257
    %s259 = vtos %v258
    %s260 = smul.f32 %s259, 14.323945
    %vm261 = vcmp.gt.f32.partialorder %v230, 0.9961947
    %v262 = vsel %vm261, 1, 0
    %v263 = vcvt.s32.f32 %v262
    %v264 = vsel %vm107, %v263, 0.0
    %265 = vadd.xlane.f32.xlu0 %v264
    %v266 = vpop.xlane.xlu0 %265
    %v267 = vrot.slane %v266, 4
    %v268 = vadd.f32 %v266, %v267
    %v269 = vrot.slane %v268, 2
    %v270 = vadd.f32 %v268, %v269
    %v271 = vrot.slane %v270, 1
    %v272 = vadd.f32 %v270, %v271
    %s273 = vtos %v272
    %s274 = smul.f32 %s273, 0.25
    %s275 = sld [smem:[#allocation2]]
    %s276 = sadd.f32 %s83, %s172
    %s277 = smul.f32 %s275, %s276
    %s278 = sadd.f32 %s277, %s222
    %s279 = scalar_lea.smem [#allocation3], 0
    %280 = sst [smem:[%s279]] %s83
    %s281 = scalar_lea.smem [#allocation3], 1
    %282 = sst [smem:[%s281]] %s118
    %s283 = scalar_lea.smem [#allocation3], 2
    %284 = sst [smem:[%s283]] %s172
    %s285 = scalar_lea.smem [#allocation3], 3
    %286 = sst [smem:[%s285]] %s206
    %s287 = scalar_lea.smem [#allocation3], 4
    %288 = sst [smem:[%s287]] %s222
    %s289 = scalar_lea.smem [#allocation3], 5
    %290 = sst [smem:[%s289]] %s276
    %s291 = scalar_lea.smem [#allocation3], 6
    %292 = sst [smem:[%s291]] %s278
    %s293 = scalar_lea.smem [#allocation3], 7
    %294 = sst [smem:[%s293]] %s274
    %s295 = scalar_lea.smem [#allocation3], 8
    %296 = sst [smem:[%s295]] %s260
    // Predicated region
    $region30: #{_vi_net_loss_stats.1} parent=1 // pred_check
      _
    $region31: #{_vi_net_loss_stats.1} parent=1 // pred_check_branch
      %298 = sbr.rel (0) target = $region33
    $region32: #{_vi_net_loss_stats.1} parent=1 // pred_region
      %s300 = ssub.s32 16, 16
      %301 = vsyncadd [#allocation4], %s300
      %304 = dma.smem_to_hbm [#allocation3], 16, %s7, [#allocation4]
    $region33: #{_vi_net_loss_stats.1} parent=1 // pred_fallthru
      _
    // Predicated region
    $region34: #{_vi_net_loss_stats.1} parent=1 // pred_check
      _
    $region35: #{_vi_net_loss_stats.1} parent=1 // pred_check_branch
      %306 = sbr.rel (0) target = $region37
    $region36: #{_vi_net_loss_stats.1} parent=1 // pred_region
      %307 = dma.done [#allocation4], 16
    $region37: #{_vi_net_loss_stats.1} parent=1 // pred_fallthru
      _
    %308 = sfence
    %309 = vsyncpa [#allocation4], 1

</llo_original>
